<compile_context>
chip_gen: v7x
topology: tpu7x:2x2x1
jax: 0.10.0
libtpu: 0.0.40
codegen_flags: <defaults>
</compile_context>

<pallas_src>
import jax
import jax.numpy as jnp
from jax.experimental import pallas as pl
from jax.experimental.pallas import tpu as pltpu


def _round_up(x: int, m: int) -> int:
    return ((x + m - 1) // m) * m


def _rope_freqs_kernel(start_pos_ref, inv_freq_ref, out_ref):
    # start_pos_ref: SMEM (1,) int32 scalar-prefetch (absolute start position)
    # inv_freq_ref : VMEM (1, half) float32
    # out_ref      : VMEM (TS, 2*half) float32 -- cos | sin packed along lanes
    ts, twice_half = out_ref.shape
    half = twice_half // 2

    # Absolute position of row 0 of this tile.
    tile_base = start_pos_ref[0] + pl.program_id(0) * ts

    # int32 iota + convert (Mosaic iota only produces 32-bit integers); the
    # convert is cheap VALU filler under the EUP-bound cos/sin below.
    pos = (jax.lax.broadcasted_iota(jnp.int32, (ts, half), 0) + tile_base
           ).astype(jnp.float32)

    # outer(t, inv_freq): (TS, half) * (1, half) broadcast.
    angles = pos * inv_freq_ref[...]

    # Single lane-dense store: cos in lanes [0:half], sin in lanes [half:].
    out_ref[...] = jnp.concatenate([jnp.cos(angles), jnp.sin(angles)], axis=-1)


class RotaryEmbedding:
    """JAX/Pallas port of the PyTorch RotaryEmbedding module."""

    _MAX_TILE_ROWS = 512   # rows per grid step for long prefill (multiple of 8)
    _SMALL_SEQ = 8         # below this, slice the cached full table (decode)

    def __init__(self, dim: int, max_seq_len: int, theta: float = 10000.0):
        assert dim % 2 == 0
        # float32 positions are exact only up to 2**24.
        assert max_seq_len <= (1 << 24)
        self.dim = dim
        self.max_seq_len = max_seq_len
        self.theta = theta
        half = dim // 2
        exponents = jnp.arange(0, dim, 2, dtype=jnp.float32) / dim
        self.inv_freq = (1.0 / (theta ** exponents)).reshape(1, half)  # (1, half)
        self._table = None  # lazily built (max_seq_len, 2*half) cos|sin table

    # ---- Pallas kernel driver -------------------------------------------
    def _freqs_packed(self, start_pos: int, seq_len: int) -> jax.Array:
        """cos|sin packed (seq_len, 2*half) for window [start_pos, start_pos+seq_len)."""
        half = self.dim // 2
        ts = max(8, min(self._MAX_TILE_ROWS, _round_up(seq_len, 8)))
        grid = (pl.cdiv(seq_len, ts),)
        start = jnp.array([start_pos], dtype=jnp.int32)

        return pl.pallas_call(
            _rope_freqs_kernel,
            out_shape=jax.ShapeDtypeStruct((seq_len, 2 * half), jnp.float32),
            grid_spec=pltpu.PrefetchScalarGridSpec(
                num_scalar_prefetch=1,
                grid=grid,
                in_specs=[
                    # full (1, half) inv_freq tile every step
                    pl.BlockSpec((1, half), lambda i, sp: (0, 0)),
                ],
                out_specs=pl.BlockSpec((ts, 2 * half), lambda i, sp: (i, 0)),
            ),
            compiler_params=pltpu.CompilerParams(
                # Independent tiles -> shard across both TCs on v7x; neutral
                # on v5e/v6e.
                dimension_semantics=("parallel",),
            ),
        )(start, self.inv_freq)

    # ---- Public API -------------------------------------------------------
    def cos_sin(self, seq_len: int, start_pos: int = 0):
        """Return (cos, sin), each (seq_len, dim/2) float32.

        Preferred entry point for downstream RoPE-apply kernels: avoids the
        extra HBM pass that assembling a complex64 table costs.
        """
        half = self.dim // 2
        assert start_pos + seq_len <= self.max_seq_len
        if seq_len < self._SMALL_SEQ:
            # Decode / tiny windows: pallas_call fixed cost >> compute, so
            # slice a table built once (with the same kernel) instead.
            if self._table is None:
                self._table = self._freqs_packed(0, self.max_seq_len)
            packed = jax.lax.dynamic_slice_in_dim(
                self._table, start_pos, seq_len, axis=0)
        else:
            packed = self._freqs_packed(start_pos, seq_len)
        return packed[:, :half], packed[:, half:]

    def __call__(self, x: jax.Array, start_pos: int = 0) -> jax.Array:
        """
        Args:
            x: (B, Seq_Len, H, Head_Dim) -- only Seq_Len is used (as in PyTorch).
            start_pos: starting absolute position.
        Returns:
            complex64 array of shape (Seq_Len, Head_Dim/2), matching
            torch.polar(ones, outer(t, inv_freq))[start_pos:start_pos+S].
        """
        seq_len = x.shape[1]
        cos, sin = self.cos_sin(seq_len, start_pos=start_pos)
        # torch.polar(1, a) = cos(a) + i*sin(a).
        # TODO(synk): fuse frequency generation into the RoPE-apply/attention
        # kernel so the complex64 materialization (extra XLA HBM pass) goes away.
        return jax.lax.complex(cos, sin)


if __name__ == "__main__":
    # Small shapes consistent with the module's forward: x is (B, Seq, H, Head_Dim)
    B, S, H, HEAD_DIM = 2, 8, 4, 32
    MAX_SEQ_LEN = 64
    START_POS = 3
    THETA = 10000.0

    key = jax.random.PRNGKey(0)
    x = jax.random.normal(key, (B, S, H, HEAD_DIM), dtype=jnp.float32)

    rope = RotaryEmbedding(dim=HEAD_DIM, max_seq_len=MAX_SEQ_LEN, theta=THETA)

    # Pure-JAX reference (mirrors the PyTorch precompute + slice).
    half = HEAD_DIM // 2
    inv_freq = 1.0 / (THETA ** (jnp.arange(0, HEAD_DIM, 2, dtype=jnp.float32) / HEAD_DIM))
    t = jnp.arange(MAX_SEQ_LEN, dtype=jnp.float32)
    angles = jnp.outer(t, inv_freq)
    full_ref = jax.lax.complex(jnp.cos(angles), jnp.sin(angles))

    # Prefill path (tiled Pallas kernel over the requested window).
    freqs_cis = jax.block_until_ready(rope(x, start_pos=START_POS))
    ref = full_ref[START_POS:START_POS + S]
    assert freqs_cis.shape == (S, half)
    assert freqs_cis.dtype == jnp.complex64
    assert jnp.allclose(freqs_cis, ref, atol=1e-5, rtol=1e-5)

    # Decode path (S=1 -> cached table built once with the same kernel).
    x_dec = x[:, :1]
    freqs_dec = jax.block_until_ready(rope(x_dec, start_pos=START_POS + S))
    ref_dec = full_ref[START_POS + S:START_POS + S + 1]
    assert freqs_dec.shape == (1, half)
    assert freqs_dec.dtype == jnp.complex64
    assert jnp.allclose(freqs_dec, ref_dec, atol=1e-5, rtol=1e-5)

    print("KERNEL_OK")
</pallas_src>

<mosaic_0001>
module attributes {stable_mosaic.version = 11 : i64} {
  func.func @_rope_freqs_kernel(%arg0: i32, %arg1: memref<1xi32, #tpu.memory_space<smem>>, %arg2: memref<1x16xf32, #tpu.memory_space<vmem>>, %arg3: memref<8x32xf32, #tpu.memory_space<vmem>>) attributes {dimension_semantics = [#tpu.dimension_semantics<parallel>], iteration_bounds = array<i64: 1>, scalar_prefetch = 1 : i64, scratch_operands = 0 : i64, tpu.core_type = #tpu.core_type<tc>, window_params = [{pipeline_mode = #tpu.pipeline_mode<synchronous>, transform_indices = @transform_0, window_bounds = array<i64: 1, 16>}, {transform_indices = @transform_1, window_bounds = array<i64: 8, 32>}]} {
    %c0 = arith.constant 0 : index
    %0 = memref.load %arg1[%c0] : memref<1xi32, #tpu.memory_space<smem>>
    %c8_i32 = arith.constant 8 : i32
    %1 = arith.muli %arg0, %c8_i32 : i32
    %2 = arith.addi %0, %1 : i32
    %3 = tpu.iota {dimensions = array<i32: 0>} : vector<8x16xi32>
    %4 = vector.broadcast %2 : i32 to vector<8x16xi32>
    %5 = arith.addi %3, %4 : vector<8x16xi32>
    %6 = arith.sitofp %5 : vector<8x16xi32> to vector<8x16xf32>
    %c0_0 = arith.constant 0 : index
    %c0_1 = arith.constant 0 : index
    %7 = vector.load %arg2[%c0_0, %c0_1] : memref<1x16xf32, #tpu.memory_space<vmem>>, vector<1x16xf32>
    %8 = vector.broadcast %7 : vector<1x16xf32> to vector<8x16xf32>
    %9 = arith.mulf %6, %8 : vector<8x16xf32>
    %10 = math.cos %9 : vector<8x16xf32>
    %11 = math.sin %9 : vector<8x16xf32>
    %12 = tpu.concatenate %10, %11 in 1 : vector<8x16xf32>, vector<8x16xf32> -> vector<8x32xf32>
    %c0_2 = arith.constant 0 : index
    %c0_3 = arith.constant 0 : index
    %13 = vector.load %arg3[%c0_2, %c0_3] : memref<8x32xf32, #tpu.memory_space<vmem>>, vector<8x32xf32>
    tpu.vector_store %arg3[%c0_2, %c0_3], %12 {strides = array<i32>} : memref<8x32xf32, #tpu.memory_space<vmem>>, vector<8x32xf32>,
    return
  }
  func.func @transform_0(%arg0: i32, %arg1: memref<1xi32, #tpu.memory_space<smem>>) -> (i32, i32) {
    %c0_i32 = arith.constant 0 : i32
    %c0_i32_0 = arith.constant 0 : i32
    %c0_i32_1 = arith.constant 0 : i32
    return %c0_i32, %c0_i32_0 : i32, i32
  }
  func.func @transform_1(%arg0: i32, %arg1: memref<1xi32, #tpu.memory_space<smem>>) -> (i32, i32) {
    %c0_i32 = arith.constant 0 : i32
    %c0_i32_0 = arith.constant 0 : i32
    return %arg0, %c0_i32 : i32, i32
  }
}

</mosaic_0001>

<llo_original>
// kernel: tpu_custom_call.1
$region0: #{tpu_custom_call.1}
  #allocation0 [shape = 'u32[]', space=smem, size = 0x4, offset = 0x4, fixed_abs, tag = 'smem constant byte address 0x4 - core index']
  #allocation1 [shape = 'u32[144,128]{1,0:T(1,128)}', space=vmem, size = 0x12000, scoped, tag = 'internal scratch']
  #allocation2 [shape = 's32[1]{0}', space=sflag, size = 0x4, scoped, tag = 'scoped memory for tpu_custom_call.1']
  #allocation3 [shape = 's32[1]{0:T(128)S(6)}', space=smem, size = 0x200, scoped, tag = 'prefetched SMEM operand 0']
  %s0 = inlined_call_operand.<no memory space> [shape: s32[1], index: 0, kind: input, shape index: {}]
  %s1 = inlined_call_operand.vmem [shape: f32[1,16], index: 1, kind: input, shape index: {}]
  %s2 = inlined_call_operand.hbm [shape: f32[8,32], index: 2, kind: output, shape index: {}]
  %s3 = sld [smem:[#allocation0]]
  $region14: #{tpu_custom_call.1} parent=0
    _
  %s5 = ssub.s32 1, %s3
  %s6 = scalar_select 0, %s5, %s3
  %7 = sst [smem:[#allocation3]] %s0
  $region1: #{tpu_custom_call.1} parent=0
    #allocation4 [shape = 'u8[4096]{0}', space=vmem, size = 0x1000, scoped, tag = 'output window, operand 0, single buffered']
    #allocation5 [shape = 's32[1]{0}', space=sflag, size = 0x4, scoped, tag = 'scoped memory for tpu_custom_call.1']
    %8 = vsyncpa [#allocation5], 0
    // Predicated region
    $region2: #{tpu_custom_call.1} parent=1 // pred_check
      _
    $region3: #{tpu_custom_call.1} parent=1 // pred_check_branch
      %10 = sbr.rel (0) target = $region5
    $region4: #{tpu_custom_call.1} parent=1 // pred_region
      _
    $region5: #{tpu_custom_call.1} parent=1 // pred_fallthru
      _
    %s11 = sld [smem:[#allocation3]]
    %s12 = smul.u32 0, 8
    %s13 = sadd.s32 %s11, %s12
    %v14 = vlaneseq
    %v15 = vshrl.u32 %v14, 7
    %v16 = vstv %s13
    %v17 = vadd.s32 %v15, %v16
    %v18 = vcvt.s32.f32 %v17
    %v19 = vld [vmem:[%s1] sm:$0x1]
    %v21 = vlaneseq
    %v22 = vshrl.u32 %v21, 7
    %v23 = vsub.s32 0, %v22
    %v24 = vrot.slane %v19, %v23
    %v26 = vmul.f32 %v18, %v24
    %v27 = vand.u32 2147483647, %v26
    %vm28 = vcmp.le.f32.partialorder %v27, 0.7853982
    %vm29 = vcmp.lt.s32.totalorder %v26, 0
    %v30 = vand.u32 %v26, 2139095040
    %v31 = vshrl.u32 %v30, 23
    %v32 = vsub.s32 %v31, 127
    %v33 = vand.u32 2147483647, %v26
    %v34 = vand.u32 %v33, 8388607
    %v35 = vor.u32 %v34, 8388608
    %v36 = vsub.s32 0, %v35
    %v37 = vadd.s32 %v32, 1
    %vm38 = vcmp.gt.s32.totalorder %v37, 0
    %v39 = vsel %vm38, %v37, 0
    %v40 = vshrl.u32 %v39, 5
    %v41 = vand.u32 %v39, 31
    %v42 = vsub.s32 32, %v41
    %v43 = vshrl.u32 683565275, %v42
    %v44 = vshll.u32 683565275, %v41
    %v45 = vshrl.u32 2475754826, %v42
    %v46 = vor.u32 %v44, %v45
    %v47 = vshll.u32 2475754826, %v41
    %v48 = vshrl.u32 2131351028, %v42
    %v49 = vor.u32 %v47, %v48
    %v50 = vshll.u32 2131351028, %v41
    %v51 = vshrl.u32 2102212464, %v42
    %v52 = vor.u32 %v50, %v51
    %v53 = vshll.u32 2102212464, %v41
    %v54 = vshrl.u32 920167782, %v42
    %v55 = vor.u32 %v53, %v54
    %v56 = vshll.u32 920167782, %v41
    %v57 = vshrl.u32 1326507024, %v42
    %v58 = vor.u32 %v56, %v57
    %vm59 = vcmp.lt.s32.totalorder %v40, 1
    %vm60 = vcmp.lt.s32.totalorder %v40, 2
    %vm61 = vcmp.lt.s32.totalorder %v40, 3
    %vm62 = vcmp.lt.s32.totalorder %v40, 4
    %v63 = vsel %vm59, %v43, %v46
    %v64 = vsel %vm62, %v52, 2102212464
    %v65 = vsel %vm61, %v49, %v64
    %v66 = vsel %vm60, %v63, %v65
    %v67 = vsel %vm59, %v46, %v49
    %v68 = vsel %vm62, %v55, 920167782
    %v69 = vsel %vm61, %v52, %v68
    %v70 = vsel %vm60, %v67, %v69
    %v71 = vsel %vm59, %v49, %v52
    %v72 = vsel %vm62, %v58, 1326507024
    %v73 = vsel %vm61, %v55, %v72
    %v74 = vsel %vm60, %v71, %v73
    %v75 = vshll.u32 %v35, 8
    %v76 = vmul.u32.u64.compose %v75, %v74
    %v77 = vextract.low.u32 %v76
    %v78 = vextract.high.u32 %v76
    %v79 = vmul.u32.u64.compose %v75, %v70
    %v80 = vextract.low.u32 %v79
    %v81 = vextract.high.u32 %v79
    %v82 = vmul.u32 %v75, %v66
    %v83 = vadd.s32 %v78, %v80
    %vm84 = vc.u32 %v78, %v80
    %v85 = vadd.s32 %v81, 1
    %v86 = vsel %vm84, %v85, %v81
    %v87 = vadd.s32 %v82, %v86
    %v88 = vadd.s32 %v87, 536870912
    %v89 = vshrl.u32 %v88, 30
    %v90 = vshll.u32 %v89, 30
    %v91 = vsub.s32 %v87, %v90
    %vm92 = vcmp.lt.s32.totalorder %v91, 0
    %v93 = vsub.s32 0, %v91
    %v94 = vsel %vm92, %v93, %v91
    %v95 = vclz %v94
    %v96 = vsub.s32 %v95, 2
    %vm97 = vcmp.gt.s32.totalorder 0, %v96
    %v98 = vsel %vm97, 0, %v96
    %v99 = vsub.s32 32, %v98
    %v100 = vshll.u32 %v91, %v98
    %v101 = vshrl.u32 %v83, %v99
    %v102 = vor.u32 %v100, %v101
    %v103 = vsub.s32 4294967266, %v98
    %v104 = vadd.s32 %v103, 127
    %v105 = vshll.u32 %v104, 23
    %v106 = vor.u32 4788187, %v105
    %v107 = vand.u32 2147483647, %v106
    %v109 = vcvt.s32.f32 %v102
    %v110 = vmul.f32 %v109, %v107
    %v111 = vxor.u32 %v110, 2147483648
    %v112 = vsel %vm29, %v111, %v110
    %v113 = vsub.s32 4, %v89
    %v114 = vsel %vm29, %v113, %v89
    %v115 = vsel %vm28, %v26, %v112
    %v116 = vsel %vm28, 0, %v114
    %v117 = vcosq.f32.pop %v115
    %v118 = vsinq.f32.pop %v115
    %vm119 = vweird.f32 %v26
    %v120 = vand.u32 %v116, 3
    %vm121 = vcmp.lt.s32.totalorder %v120, 2
    %vm122 = vcmp.eq.s32.totalorder %v120, 0
    %v123 = vxor.u32 %v118, 2147483648
    %v124 = vsel %vm122, %v117, %v123
    %vm125 = vcmp.eq.s32.totalorder %v120, 2
    %v126 = vxor.u32 %v117, 2147483648
    %v127 = vsel %vm125, %v126, %v118
    %v128 = vsel %vm121, %v124, %v127
    %v129 = vsel %vm119, nan, %v128
    %v130 = vand.u32 2147483647, %v26
    %vm131 = vcmp.le.f32.partialorder %v130, 0.7853982
    %vm132 = vcmp.lt.s32.totalorder %v26, 0
    %v133 = vand.u32 %v26, 2139095040
    %v134 = vshrl.u32 %v133, 23
    %v135 = vsub.s32 %v134, 127
    %v136 = vand.u32 2147483647, %v26
    %v137 = vand.u32 %v136, 8388607
    %v138 = vor.u32 %v137, 8388608
    %v139 = vsub.s32 0, %v138
    %v140 = vadd.s32 %v135, 1
    %vm141 = vcmp.gt.s32.totalorder %v140, 0
    %v142 = vsel %vm141, %v140, 0
    %v143 = vshrl.u32 %v142, 5
    %v144 = vand.u32 %v142, 31
    %v145 = vsub.s32 32, %v144
    %v146 = vshrl.u32 683565275, %v145
    %v147 = vshll.u32 683565275, %v144
    %v148 = vshrl.u32 2475754826, %v145
    %v149 = vor.u32 %v147, %v148
    %v150 = vshll.u32 2475754826, %v144
    %v151 = vshrl.u32 2131351028, %v145
    %v152 = vor.u32 %v150, %v151
    %v153 = vshll.u32 2131351028, %v144
    %v154 = vshrl.u32 2102212464, %v145
    %v155 = vor.u32 %v153, %v154
    %v156 = vshll.u32 2102212464, %v144
    %v157 = vshrl.u32 920167782, %v145
    %v158 = vor.u32 %v156, %v157
    %v159 = vshll.u32 920167782, %v144
    %v160 = vshrl.u32 1326507024, %v145
    %v161 = vor.u32 %v159, %v160
    %vm162 = vcmp.lt.s32.totalorder %v143, 1
    %vm163 = vcmp.lt.s32.totalorder %v143, 2
    %vm164 = vcmp.lt.s32.totalorder %v143, 3
    %vm165 = vcmp.lt.s32.totalorder %v143, 4
    %v166 = vsel %vm162, %v146, %v149
    %v167 = vsel %vm165, %v155, 2102212464
    %v168 = vsel %vm164, %v152, %v167
    %v169 = vsel %vm163, %v166, %v168
    %v170 = vsel %vm162, %v149, %v152
    %v171 = vsel %vm165, %v158, 920167782
    %v172 = vsel %vm164, %v155, %v171
    %v173 = vsel %vm163, %v170, %v172
    %v174 = vsel %vm162, %v152, %v155
    %v175 = vsel %vm165, %v161, 1326507024
    %v176 = vsel %vm164, %v158, %v175
    %v177 = vsel %vm163, %v174, %v176
    %v178 = vshll.u32 %v138, 8
    %v179 = vmul.u32.u64.compose %v178, %v177
    %v180 = vextract.low.u32 %v179
    %v181 = vextract.high.u32 %v179
    %v182 = vmul.u32.u64.compose %v178, %v173
    %v183 = vextract.low.u32 %v182
    %v184 = vextract.high.u32 %v182
    %v185 = vmul.u32 %v178, %v169
    %v186 = vadd.s32 %v181, %v183
    %vm187 = vc.u32 %v181, %v183
    %v188 = vadd.s32 %v184, 1
    %v189 = vsel %vm187, %v188, %v184
    %v190 = vadd.s32 %v185, %v189
    %v191 = vadd.s32 %v190, 536870912
    %v192 = vshrl.u32 %v191, 30
    %v193 = vshll.u32 %v192, 30
    %v194 = vsub.s32 %v190, %v193
    %vm195 = vcmp.lt.s32.totalorder %v194, 0
    %v196 = vsub.s32 0, %v194
    %v197 = vsel %vm195, %v196, %v194
    %v198 = vclz %v197
    %v199 = vsub.s32 %v198, 2
    %vm200 = vcmp.gt.s32.totalorder 0, %v199
    %v201 = vsel %vm200, 0, %v199
    %v202 = vsub.s32 32, %v201
    %v203 = vshll.u32 %v194, %v201
    %v204 = vshrl.u32 %v186, %v202
    %v205 = vor.u32 %v203, %v204
    %v206 = vsub.s32 4294967266, %v201
    %v207 = vadd.s32 %v206, 127
    %v208 = vshll.u32 %v207, 23
    %v209 = vor.u32 4788187, %v208
    %v210 = vand.u32 2147483647, %v209
    %v212 = vcvt.s32.f32 %v205
    %v213 = vmul.f32 %v212, %v210
    %v214 = vxor.u32 %v213, 2147483648
    %v215 = vsel %vm132, %v214, %v213
    %v216 = vsub.s32 4, %v192
    %v217 = vsel %vm132, %v216, %v192
    %v218 = vsel %vm131, %v26, %v215
    %v219 = vsel %vm131, 0, %v217
    %v220 = vcosq.f32.pop %v218
    %v221 = vsinq.f32.pop %v218
    %vm222 = vweird.f32 %v26
    %v223 = vadd.s32 %v219, 3
    %v224 = vand.u32 %v223, 3
    %vm225 = vcmp.lt.s32.totalorder %v224, 2
    %vm226 = vcmp.eq.s32.totalorder %v224, 0
    %v227 = vxor.u32 %v221, 2147483648
    %v228 = vsel %vm226, %v220, %v227
    %vm229 = vcmp.eq.s32.totalorder %v224, 2
    %v230 = vxor.u32 %v220, 2147483648
    %v231 = vsel %vm229, %v230, %v221
    %v232 = vsel %vm225, %v228, %v231
    %v233 = vsel %vm222, nan, %v232
    %235 = vrot.lane.b32.xlu0 %v233, 16
    %v236 = vpop.permute.xlu0 %235
    %vm238 = vcmask 130048
    %v239 = vsel %vm238, %v129, %v236
    %vm240 = vcmask 261120
    %241 = vst.msk [vmem:[#allocation4] sm:$0xff] %vm240, %v239
    // Predicated region
    $region6: #{tpu_custom_call.1} parent=1 // pred_check
      _
    $region7: #{tpu_custom_call.1} parent=1 // pred_check_branch
      %243 = sbr.rel (0) target = $region9
    $region8: #{tpu_custom_call.1} parent=1 // pred_region
      %s245 = ssub.s32 128, 128
      %246 = vsyncadd [#allocation5], %s245
      %s248 = sshll.u32 [#allocation4], 4
      %s249 = int_to_ptr.vmem [resolvable:$true] %s248
      %251 = dma.vmem_to_hbm [thread:$0]  %s249, 128, %s2, [#allocation5]
    $region9: #{tpu_custom_call.1} parent=1 // pred_fallthru
      _
    // Predicated region
    $region10: #{tpu_custom_call.1} parent=1 // pred_check
      _
    $region11: #{tpu_custom_call.1} parent=1 // pred_check_branch
      %253 = sbr.rel (0) target = $region13
    $region12: #{tpu_custom_call.1} parent=1 // pred_region
      %254 = dma.done [#allocation5], 128
    $region13: #{tpu_custom_call.1} parent=1 // pred_fallthru
      _
    %255 = vsyncpa [#allocation5], 1

</llo_original>
